<compile_context>
chip_gen: v7x
topology: tpu7x:2x2x1
jax: 0.10.0
libtpu: 0.0.40
codegen_flags: <defaults>
</compile_context>

<pallas_src>
import jax
import jax.numpy as jnp
from jax.experimental import pallas as pl
from jax.experimental.pallas import tpu as pltpu


def _silu(z):
    return z * jax.nn.sigmoid(z)


def _round_up(a, b):
    return ((a + b - 1) // b) * b


def _make_kernel(H, O, combined):
    """Build the kernel body for given (static) channel sizes / output layout."""

    def kernel(x_ref, v_ref, w12_ref, wu1x_ref, wu1v_ref, bu1_ref,
               wu2x_ref, wu2g_ref, bu2x_ref, bu2g_ref, *out_refs):
        if combined:
            (out_ref,) = out_refs
        else:
            xo_ref, vo_ref = out_refs

        x = x_ref[...]
        w12 = w12_ref[...]                       # (H, H+O): vec1_proj || vec2_proj
        wdt = w12.dtype                          # compute dtype of matmul operands

        # vec1 = || vec1_proj(v) || over the 3 spatial components
        # vec2 = vec2_proj(v)  (per component, packed along lanes)
        sumsq = jnp.zeros((x.shape[0], H), jnp.float32)
        vec2_parts = []
        for c in range(3):                       # static, unrolled
            vc = v_ref[:, c * H:(c + 1) * H]     # (TN, H)
            p = jnp.dot(vc, w12, preferred_element_type=jnp.float32)  # (TN, H+O)
            p1 = p[:, :H]
            sumsq = sumsq + p1 * p1
            p2 = p[:, H:]                        # vec2 component, f32
            if combined:
                vec2_parts.append(p2)
            else:
                # stage vec2 straight into the output buffer (clean lane blocks
                # since O % 128 == 0) -> no 3x(TN,O) live intermediate
                vo_ref[:, c * O:(c + 1) * O] = p2
        vec1 = jnp.sqrt(sumsq)                   # (TN, H), f32

        # update_net( concat([x, vec1], -1) ): concat folded into two matmuls
        # against the pre-split halves of wu1.
        h = (
            jnp.dot(x, wu1x_ref[...], preferred_element_type=jnp.float32)
            + jnp.dot(vec1.astype(wdt), wu1v_ref[...],
                      preferred_element_type=jnp.float32)
            + bu1_ref[...]
        )
        h = _silu(h).astype(wdt)

        # Second linear split so both results are lane-aligned.
        x_out = jnp.dot(h, wu2x_ref[...], preferred_element_type=jnp.float32) + bu2x_ref[...]
        gate = jnp.dot(h, wu2g_ref[...], preferred_element_type=jnp.float32) + bu2g_ref[...]
        x_out = _silu(x_out)

        if combined:
            # one lane-dense (TN, 4*O) store: [x_out || gate*vec2_x|y|z]
            out_ref[...] = jnp.concatenate(
                [x_out] + [gate * vec2_parts[c] for c in range(3)], axis=-1)
        else:
            xo_ref[...] = x_out
            vo_ref[...] = vo_ref[...] * jnp.concatenate([gate, gate, gate], axis=-1)

    return kernel


def gated_equivariant_block(x, v, params, *, tile_n=512,
                            compute_dtype=jnp.bfloat16):
    """x: (N, H) f32, v: (N, 3, H) f32 -> (x_out (N, O), v_out (N, 3, O)) f32."""
    N, H = x.shape
    O = params["w2"].shape[1]
    in_bytes = jnp.dtype(compute_dtype).itemsize

    # ---- host-side weight prep (done once, lane-aligned kernel matmuls) ----
    w12 = jnp.concatenate([params["w1"], params["w2"]], axis=1)  # (H, H+O)
    wu1x = params["wu1"][:H, :]
    wu1v = params["wu1"][H:, :]
    wu2x = params["wu2"][:, :O]
    wu2g = params["wu2"][:, O:]
    bu1 = params["bu1"].astype(jnp.float32)
    bu2x = params["bu2"][:, :O].astype(jnp.float32)
    bu2g = params["bu2"][:, O:].astype(jnp.float32)

    # matmul operands in compute dtype; biases & accumulation stay f32
    w12 = w12.astype(compute_dtype)
    wu1x = wu1x.astype(compute_dtype)
    wu1v = wu1v.astype(compute_dtype)
    wu2x = wu2x.astype(compute_dtype)
    wu2g = wu2g.astype(compute_dtype)
    xc = x.astype(compute_dtype)
    # contiguous (free) reshape instead of a transpose: (N, 3, H) -> (N, 3H)
    v2d = v.reshape(N, 3 * H).astype(compute_dtype)

    # ---- VMEM accounting & tile-size derivation (fits v7x's 64 MiB) ----
    weight_bytes = (H * (H + O) + 2 * H * H + 2 * H * O) * in_bytes + (H + 2 * O) * 4
    per_row = (
        2 * 4 * H * in_bytes        # double-buffered x + v2d tiles
        + 2 * 4 * O * 4             # double-buffered f32 output tiles
        + (2 * H + 6 * O) * 4       # rough in-kernel f32 intermediates
    )
    budget = 40 * 1024 * 1024       # conservative across v5e/v6e/v7x
    tn_cap = max(8, ((budget - weight_bytes) // per_row) // 8 * 8)

    n8 = _round_up(N, 8)
    tn = min(max(8, _round_up(tile_n, 8)), tn_cap, n8)
    # v7x megacore: make sure there are >= 2 grid steps whenever possible
    if n8 // tn < 2 and n8 >= 16:
        tn = max(8, _round_up(-(-n8 // 2), 8))
    # avoid the host-side jnp.pad copy if a nearby tile size divides N exactly
    if n8 % tn != 0:
        cand = tn
        while cand >= max(8, tn // 2):
            if n8 % cand == 0:
                tn = cand
                break
            cand -= 8

    n_pad = _round_up(N, tn)
    if n_pad != N:
        xc = jnp.pad(xc, ((0, n_pad - N), (0, 0)))
        v2d = jnp.pad(v2d, ((0, n_pad - N), (0, 0)))
    grid = (n_pad // tn,)

    vmem_limit = int(min(max(weight_bytes + tn * per_row + (4 << 20), 32 << 20),
                         64 << 20))

    # ---- specs ----
    def wspec(shape):
        nd = len(shape)
        # constant index_map -> fetched once; single-buffer to halve its VMEM
        return pl.BlockSpec(shape, lambda i, _nd=nd: (0,) * _nd,
                            pipeline_mode=pl.Buffered(1))

    in_specs = [
        pl.BlockSpec((tn, H), lambda i: (i, 0)),        # x
        pl.BlockSpec((tn, 3 * H), lambda i: (i, 0)),    # v (lane-packed)
        wspec((H, H + O)),                              # w12
        wspec((H, H)),                                  # wu1x
        wspec((H, H)),                                  # wu1v
        wspec((1, H)),                                  # bu1
        wspec((H, O)),                                  # wu2x
        wspec((H, O)),                                  # wu2g
        wspec((1, O)),                                  # bu2x
        wspec((1, O)),                                  # bu2g
    ]

    combined = (O % 128 != 0)
    if combined:
        out_shape = jax.ShapeDtypeStruct((n_pad, 4 * O), jnp.float32)
        out_specs = pl.BlockSpec((tn, 4 * O), lambda i: (i, 0))
    else:
        out_shape = (
            jax.ShapeDtypeStruct((n_pad, O), jnp.float32),
            jax.ShapeDtypeStruct((n_pad, 3 * O), jnp.float32),
        )
        out_specs = [
            pl.BlockSpec((tn, O), lambda i: (i, 0)),
            pl.BlockSpec((tn, 3 * O), lambda i: (i, 0)),
        ]

    outs = pl.pallas_call(
        _make_kernel(H, O, combined),
        out_shape=out_shape,
        grid_spec=pltpu.PrefetchScalarGridSpec(
            num_scalar_prefetch=0,
            grid=grid,
            in_specs=in_specs,
            out_specs=out_specs,
        ),
        compiler_params=pltpu.CompilerParams(
            dimension_semantics=("parallel",),
            vmem_limit_bytes=vmem_limit,
        ),
    )(xc, v2d, w12, wu1x, wu1v, bu1, wu2x, wu2g, bu2x, bu2g)

    if combined:
        x_out = outs[:N, :O]
        v_out = outs[:N, O:].reshape(N, 3, O)
    else:
        x_out, v_out = outs
        x_out = x_out[:N]
        v_out = v_out[:N].reshape(N, 3, O)
    return x_out, v_out


def init_params(key, hidden_channels, out_channels):
    """Deterministic xavier-uniform-style init; weights stored as (in, out)."""
    def xavier(k, fan_in, fan_out):
        bound = jnp.sqrt(6.0 / (fan_in + fan_out))
        return jax.random.uniform(k, (fan_in, fan_out), jnp.float32, -bound, bound)

    k1, k2, k3, k4 = jax.random.split(key, 4)
    H, O = hidden_channels, out_channels
    return {
        "w1": xavier(k1, H, H),            # vec1_proj
        "w2": xavier(k2, H, O),            # vec2_proj
        "wu1": xavier(k3, 2 * H, H),       # update_net[0]
        "bu1": jnp.zeros((1, H), jnp.float32),
        "wu2": xavier(k4, H, 2 * O),       # update_net[2]
        "bu2": jnp.zeros((1, 2 * O), jnp.float32),
    }


def reference(x, v, p):
    """Pure-JAX reference matching the PyTorch forward."""
    vec1 = jnp.linalg.norm(jnp.einsum("nch,ho->nco", v, p["w1"]), axis=-2)
    vec2 = jnp.einsum("nch,ho->nco", v, p["w2"])
    xc = jnp.concatenate([x, vec1], axis=-1)
    h = jax.nn.silu(xc @ p["wu1"] + p["bu1"])
    u = h @ p["wu2"] + p["bu2"]
    O = p["w2"].shape[1]
    x_out, gate = u[:, :O], u[:, O:]
    v_out = gate[:, None, :] * vec2
    return jax.nn.silu(x_out), v_out


if __name__ == "__main__":
    hidden_channels = 32
    out_channels = 16
    N = 16

    key = jax.random.PRNGKey(0)
    kx, kv, kp = jax.random.split(key, 3)
    x = jax.random.normal(kx, (N, hidden_channels), jnp.float32)
    v = jax.random.normal(kv, (N, 3, hidden_channels), jnp.float32)
    params = init_params(kp, hidden_channels, out_channels)

    x_ref, v_ref = reference(x, v, params)

    # Exact path (f32 operands) -- tight tolerance.
    x32, v32 = gated_equivariant_block(x, v, params, compute_dtype=jnp.float32)
    jax.block_until_ready((x32, v32))
    assert x32.shape == (N, out_channels)
    assert v32.shape == (N, 3, out_channels)
    assert jnp.allclose(x32, x_ref, atol=1e-5, rtol=1e-5)
    assert jnp.allclose(v32, v_ref, atol=1e-5, rtol=1e-5)

    # Default fast path (bf16 operands, f32 accumulation) -- relaxed tolerance.
    xbf, vbf = gated_equivariant_block(x, v, params)
    jax.block_until_ready((xbf, vbf))
    assert xbf.shape == (N, out_channels)
    assert vbf.shape == (N, 3, out_channels)
    assert jnp.allclose(xbf, x_ref, atol=1e-1, rtol=1e-1)
    assert jnp.allclose(vbf, v_ref, atol=1e-1, rtol=1e-1)

    print("KERNEL_OK")
</pallas_src>

<mosaic_0001>
module attributes {stable_mosaic.version = 11 : i64} {
  func.func @kernel(%arg0: i32, %arg1: memref<8x32xf32, #tpu.memory_space<vmem>>, %arg2: memref<8x96xf32, #tpu.memory_space<vmem>>, %arg3: memref<32x48xf32, #tpu.memory_space<vmem>>, %arg4: memref<32x32xf32, #tpu.memory_space<vmem>>, %arg5: memref<32x32xf32, #tpu.memory_space<vmem>>, %arg6: memref<1x32xf32, #tpu.memory_space<vmem>>, %arg7: memref<32x16xf32, #tpu.memory_space<vmem>>, %arg8: memref<32x16xf32, #tpu.memory_space<vmem>>, %arg9: memref<1x16xf32, #tpu.memory_space<vmem>>, %arg10: memref<1x16xf32, #tpu.memory_space<vmem>>, %arg11: memref<8x64xf32, #tpu.memory_space<vmem>>) attributes {dimension_semantics = [#tpu.dimension_semantics<parallel>], iteration_bounds = array<i64: 2>, scalar_prefetch = 0 : i64, scratch_operands = 0 : i64, tpu.core_type = #tpu.core_type<tc>, window_params = [{transform_indices = @transform_0, window_bounds = array<i64: 8, 32>}, {transform_indices = @transform_1, window_bounds = array<i64: 8, 96>}, {pipeline_mode = #tpu.pipeline_mode<synchronous>, transform_indices = @transform_2, window_bounds = array<i64: 32, 48>}, {pipeline_mode = #tpu.pipeline_mode<synchronous>, transform_indices = @transform_3, window_bounds = array<i64: 32, 32>}, {pipeline_mode = #tpu.pipeline_mode<synchronous>, transform_indices = @transform_4, window_bounds = array<i64: 32, 32>}, {pipeline_mode = #tpu.pipeline_mode<synchronous>, transform_indices = @transform_5, window_bounds = array<i64: 1, 32>}, {pipeline_mode = #tpu.pipeline_mode<synchronous>, transform_indices = @transform_6, window_bounds = array<i64: 32, 16>}, {pipeline_mode = #tpu.pipeline_mode<synchronous>, transform_indices = @transform_7, window_bounds = array<i64: 32, 16>}, {pipeline_mode = #tpu.pipeline_mode<synchronous>, transform_indices = @transform_8, window_bounds = array<i64: 1, 16>}, {pipeline_mode = #tpu.pipeline_mode<synchronous>, transform_indices = @transform_9, window_bounds = array<i64: 1, 16>}, {transform_indices = @transform_10, window_bounds = array<i64: 8, 64>}]} {
    %c0 = arith.constant 0 : index
    %c0_0 = arith.constant 0 : index
    %0 = vector.load %arg1[%c0, %c0_0] : memref<8x32xf32, #tpu.memory_space<vmem>>, vector<8x32xf32>
    %c0_1 = arith.constant 0 : index
    %c0_2 = arith.constant 0 : index
    %1 = vector.load %arg3[%c0_1, %c0_2] : memref<32x48xf32, #tpu.memory_space<vmem>>, vector<32x48xf32>
    %cst = arith.constant 0.000000e+00 : f32
    %2 = vector.broadcast %cst : f32 to vector<8x32xf32>
    %c0_3 = arith.constant 0 : index
    %c0_4 = arith.constant 0 : index
    %3 = vector.load %arg2[%c0_3, %c0_4] : memref<8x96xf32, #tpu.memory_space<vmem>>, vector<8x32xf32>
    %cst_5 = arith.constant dense<0.000000e+00> : vector<8x48xf32>
    %4 = tpu.matmul %3, %1, %cst_5 {dimension_numbers = #tpu.dot_dimension_numbers<[1], [0], [0], [1], [0, 0, 1, 1], [], []>} : vector<8x32xf32>, vector<32x48xf32>, vector<8x48xf32> -> vector<8x48xf32>
    %5 = vector.extract_strided_slice %4 {offsets = [0, 0], sizes = [8, 32], strides = [1, 1]} : vector<8x48xf32> to vector<8x32xf32>
    %6 = arith.mulf %5, %5 : vector<8x32xf32>
    %7 = arith.addf %2, %6 : vector<8x32xf32>
    %8 = vector.extract_strided_slice %4 {offsets = [0, 32], sizes = [8, 16], strides = [1, 1]} : vector<8x48xf32> to vector<8x16xf32>
    %c0_6 = arith.constant 0 : index
    %c32 = arith.constant 32 : index
    %9 = vector.load %arg2[%c0_6, %c32] : memref<8x96xf32, #tpu.memory_space<vmem>>, vector<8x32xf32>
    %cst_7 = arith.constant dense<0.000000e+00> : vector<8x48xf32>
    %10 = tpu.matmul %9, %1, %cst_7 {dimension_numbers = #tpu.dot_dimension_numbers<[1], [0], [0], [1], [0, 0, 1, 1], [], []>} : vector<8x32xf32>, vector<32x48xf32>, vector<8x48xf32> -> vector<8x48xf32>
    %11 = vector.extract_strided_slice %10 {offsets = [0, 0], sizes = [8, 32], strides = [1, 1]} : vector<8x48xf32> to vector<8x32xf32>
    %12 = arith.mulf %11, %11 : vector<8x32xf32>
    %13 = arith.addf %7, %12 : vector<8x32xf32>
    %14 = vector.extract_strided_slice %10 {offsets = [0, 32], sizes = [8, 16], strides = [1, 1]} : vector<8x48xf32> to vector<8x16xf32>
    %c0_8 = arith.constant 0 : index
    %c64 = arith.constant 64 : index
    %15 = vector.load %arg2[%c0_8, %c64] : memref<8x96xf32, #tpu.memory_space<vmem>>, vector<8x32xf32>
    %cst_9 = arith.constant dense<0.000000e+00> : vector<8x48xf32>
    %16 = tpu.matmul %15, %1, %cst_9 {dimension_numbers = #tpu.dot_dimension_numbers<[1], [0], [0], [1], [0, 0, 1, 1], [], []>} : vector<8x32xf32>, vector<32x48xf32>, vector<8x48xf32> -> vector<8x48xf32>
    %17 = vector.extract_strided_slice %16 {offsets = [0, 0], sizes = [8, 32], strides = [1, 1]} : vector<8x48xf32> to vector<8x32xf32>
    %18 = arith.mulf %17, %17 : vector<8x32xf32>
    %19 = arith.addf %13, %18 : vector<8x32xf32>
    %20 = vector.extract_strided_slice %16 {offsets = [0, 32], sizes = [8, 16], strides = [1, 1]} : vector<8x48xf32> to vector<8x16xf32>
    %21 = math.sqrt %19 : vector<8x32xf32>
    %c0_10 = arith.constant 0 : index
    %c0_11 = arith.constant 0 : index
    %22 = vector.load %arg4[%c0_10, %c0_11] : memref<32x32xf32, #tpu.memory_space<vmem>>, vector<32x32xf32>
    %cst_12 = arith.constant dense<0.000000e+00> : vector<8x32xf32>
    %23 = tpu.matmul %0, %22, %cst_12 {dimension_numbers = #tpu.dot_dimension_numbers<[1], [0], [0], [1], [0, 0, 1, 1], [], []>} : vector<8x32xf32>, vector<32x32xf32>, vector<8x32xf32> -> vector<8x32xf32>
    %c0_13 = arith.constant 0 : index
    %c0_14 = arith.constant 0 : index
    %24 = vector.load %arg5[%c0_13, %c0_14] : memref<32x32xf32, #tpu.memory_space<vmem>>, vector<32x32xf32>
    %cst_15 = arith.constant dense<0.000000e+00> : vector<8x32xf32>
    %25 = tpu.matmul %21, %24, %cst_15 {dimension_numbers = #tpu.dot_dimension_numbers<[1], [0], [0], [1], [0, 0, 1, 1], [], []>} : vector<8x32xf32>, vector<32x32xf32>, vector<8x32xf32> -> vector<8x32xf32>
    %26 = arith.addf %23, %25 : vector<8x32xf32>
    %c0_16 = arith.constant 0 : index
    %c0_17 = arith.constant 0 : index
    %27 = vector.load %arg6[%c0_16, %c0_17] : memref<1x32xf32, #tpu.memory_space<vmem>>, vector<1x32xf32>
    %28 = vector.broadcast %27 : vector<1x32xf32> to vector<8x32xf32>
    %29 = arith.addf %26, %28 : vector<8x32xf32>
    %30 = arith.negf %29 : vector<8x32xf32>
    %31 = math.exp %30 : vector<8x32xf32>
    %cst_18 = arith.constant 1.000000e+00 : f32
    %32 = vector.broadcast %cst_18 : f32 to vector<8x32xf32>
    %33 = arith.addf %32, %31 : vector<8x32xf32>
    %34 = arith.divf %32, %33 : vector<8x32xf32>
    %35 = arith.mulf %29, %34 : vector<8x32xf32>
    %c0_19 = arith.constant 0 : index
    %c0_20 = arith.constant 0 : index
    %36 = vector.load %arg7[%c0_19, %c0_20] : memref<32x16xf32, #tpu.memory_space<vmem>>, vector<32x16xf32>
    %cst_21 = arith.constant dense<0.000000e+00> : vector<8x16xf32>
    %37 = tpu.matmul %35, %36, %cst_21 {dimension_numbers = #tpu.dot_dimension_numbers<[1], [0], [0], [1], [0, 0, 1, 1], [], []>} : vector<8x32xf32>, vector<32x16xf32>, vector<8x16xf32> -> vector<8x16xf32>
    %c0_22 = arith.constant 0 : index
    %c0_23 = arith.constant 0 : index
    %38 = vector.load %arg9[%c0_22, %c0_23] : memref<1x16xf32, #tpu.memory_space<vmem>>, vector<1x16xf32>
    %39 = vector.broadcast %38 : vector<1x16xf32> to vector<8x16xf32>
    %40 = arith.addf %37, %39 : vector<8x16xf32>
    %c0_24 = arith.constant 0 : index
    %c0_25 = arith.constant 0 : index
    %41 = vector.load %arg8[%c0_24, %c0_25] : memref<32x16xf32, #tpu.memory_space<vmem>>, vector<32x16xf32>
    %cst_26 = arith.constant dense<0.000000e+00> : vector<8x16xf32>
    %42 = tpu.matmul %35, %41, %cst_26 {dimension_numbers = #tpu.dot_dimension_numbers<[1], [0], [0], [1], [0, 0, 1, 1], [], []>} : vector<8x32xf32>, vector<32x16xf32>, vector<8x16xf32> -> vector<8x16xf32>
    %c0_27 = arith.constant 0 : index
    %c0_28 = arith.constant 0 : index
    %43 = vector.load %arg10[%c0_27, %c0_28] : memref<1x16xf32, #tpu.memory_space<vmem>>, vector<1x16xf32>
    %44 = vector.broadcast %43 : vector<1x16xf32> to vector<8x16xf32>
    %45 = arith.addf %42, %44 : vector<8x16xf32>
    %46 = arith.negf %40 : vector<8x16xf32>
    %47 = math.exp %46 : vector<8x16xf32>
    %cst_29 = arith.constant 1.000000e+00 : f32
    %48 = vector.broadcast %cst_29 : f32 to vector<8x16xf32>
    %49 = arith.addf %48, %47 : vector<8x16xf32>
    %50 = arith.divf %48, %49 : vector<8x16xf32>
    %51 = arith.mulf %40, %50 : vector<8x16xf32>
    %52 = arith.mulf %45, %8 : vector<8x16xf32>
    %53 = arith.mulf %45, %14 : vector<8x16xf32>
    %54 = arith.mulf %45, %20 : vector<8x16xf32>
    %55 = tpu.concatenate %51, %52, %53, %54 in 1 : vector<8x16xf32>, vector<8x16xf32>, vector<8x16xf32>, vector<8x16xf32> -> vector<8x64xf32>
    %c0_30 = arith.constant 0 : index
    %c0_31 = arith.constant 0 : index
    %56 = vector.load %arg11[%c0_30, %c0_31] : memref<8x64xf32, #tpu.memory_space<vmem>>, vector<8x64xf32>
    tpu.vector_store %arg11[%c0_30, %c0_31], %55 {strides = array<i32>} : memref<8x64xf32, #tpu.memory_space<vmem>>, vector<8x64xf32>,
    return
  }
  func.func @transform_0(%arg0: i32) -> (i32, i32) {
    %c0_i32 = arith.constant 0 : i32
    %c0_i32_0 = arith.constant 0 : i32
    return %arg0, %c0_i32 : i32, i32
  }
  func.func @transform_1(%arg0: i32) -> (i32, i32) {
    %c0_i32 = arith.constant 0 : i32
    %c0_i32_0 = arith.constant 0 : i32
    return %arg0, %c0_i32 : i32, i32
  }
  func.func @transform_2(%arg0: i32) -> (i32, i32) {
    %c0_i32 = arith.constant 0 : i32
    %c0_i32_0 = arith.constant 0 : i32
    %c0_i32_1 = arith.constant 0 : i32
    return %c0_i32, %c0_i32_0 : i32, i32
  }
  func.func @transform_3(%arg0: i32) -> (i32, i32) {
    %c0_i32 = arith.constant 0 : i32
    %c0_i32_0 = arith.constant 0 : i32
    %c0_i32_1 = arith.constant 0 : i32
    return %c0_i32, %c0_i32_0 : i32, i32
  }
  func.func @transform_4(%arg0: i32) -> (i32, i32) {
    %c0_i32 = arith.constant 0 : i32
    %c0_i32_0 = arith.constant 0 : i32
    %c0_i32_1 = arith.constant 0 : i32
    return %c0_i32, %c0_i32_0 : i32, i32
  }
  func.func @transform_5(%arg0: i32) -> (i32, i32) {
    %c0_i32 = arith.constant 0 : i32
    %c0_i32_0 = arith.constant 0 : i32
    %c0_i32_1 = arith.constant 0 : i32
    return %c0_i32, %c0_i32_0 : i32, i32
  }
  func.func @transform_6(%arg0: i32) -> (i32, i32) {
    %c0_i32 = arith.constant 0 : i32
    %c0_i32_0 = arith.constant 0 : i32
    %c0_i32_1 = arith.constant 0 : i32
    return %c0_i32, %c0_i32_0 : i32, i32
  }
  func.func @transform_7(%arg0: i32) -> (i32, i32) {
    %c0_i32 = arith.constant 0 : i32
    %c0_i32_0 = arith.constant 0 : i32
    %c0_i32_1 = arith.constant 0 : i32
    return %c0_i32, %c0_i32_0 : i32, i32
  }
  func.func @transform_8(%arg0: i32) -> (i32, i32) {
    %c0_i32 = arith.constant 0 : i32
    %c0_i32_0 = arith.constant 0 : i32
    %c0_i32_1 = arith.constant 0 : i32
    return %c0_i32, %c0_i32_0 : i32, i32
  }
  func.func @transform_9(%arg0: i32) -> (i32, i32) {
    %c0_i32 = arith.constant 0 : i32
    %c0_i32_0 = arith.constant 0 : i32
    %c0_i32_1 = arith.constant 0 : i32
    return %c0_i32, %c0_i32_0 : i32, i32
  }
  func.func @transform_10(%arg0: i32) -> (i32, i32) {
    %c0_i32 = arith.constant 0 : i32
    %c0_i32_0 = arith.constant 0 : i32
    return %arg0, %c0_i32 : i32, i32
  }
}

</mosaic_0001>

<llo_original>
// kernel: tpu_custom_call.1
$region0: #{tpu_custom_call.1}
  #allocation0 [shape = 'u32[]', space=smem, size = 0x4, offset = 0x4, fixed_abs, tag = 'smem constant byte address 0x4 - core index']
  #allocation1 [shape = 'u32[144,128]{1,0:T(1,128)}', space=vmem, size = 0x12000, scoped, tag = 'internal scratch']
  %s0 = inlined_call_operand.hbm [shape: f32[16,32], index: 0, kind: input, shape index: {}]
  %s1 = inlined_call_operand.hbm [shape: f32[16,96], index: 1, kind: input, shape index: {}]
  %s2 = inlined_call_operand.vmem [shape: f32[32,48], index: 2, kind: input, shape index: {}]
  %s3 = inlined_call_operand.vmem [shape: f32[32,32], index: 3, kind: input, shape index: {}]
  %s4 = inlined_call_operand.vmem [shape: f32[32,32], index: 4, kind: input, shape index: {}]
  %s5 = inlined_call_operand.vmem [shape: f32[1,32], index: 5, kind: input, shape index: {}]
  %s6 = inlined_call_operand.vmem [shape: f32[32,16], index: 6, kind: input, shape index: {}]
  %s7 = inlined_call_operand.vmem [shape: f32[32,16], index: 7, kind: input, shape index: {}]
  %s8 = inlined_call_operand.vmem [shape: f32[1,16], index: 8, kind: input, shape index: {}]
  %s9 = inlined_call_operand.vmem [shape: f32[1,16], index: 9, kind: input, shape index: {}]
  %s10 = inlined_call_operand.hbm [shape: f32[16,64], index: 10, kind: output, shape index: {}]
  %s11 = sld [smem:[#allocation0]]
  $region81: #{tpu_custom_call.1} parent=0
    _
  %s13 = ssub.s32 1, %s11
  %s14 = scalar_select 0, %s13, %s11
  $region1: #{tpu_custom_call.1} parent=0
    #allocation2 [shape = 'u8[8192]{0}', space=vmem, size = 0x2000, scoped, tag = 'input window, operand 0']
    #allocation3 [shape = 's32[2]{0}', space=sflag, size = 0x8, scoped, tag = 'scoped memory for tpu_custom_call.1']
    #allocation4 [shape = 's32[2]{0}', space=sflag, size = 0x8, scoped, tag = 'scoped memory for tpu_custom_call.1']
    #allocation5 [shape = 'u8[8192]{0}', space=vmem, size = 0x2000, scoped, tag = 'input window, operand 1']
    #allocation6 [shape = 's32[2]{0}', space=sflag, size = 0x8, scoped, tag = 'scoped memory for tpu_custom_call.1']
    #allocation7 [shape = 'u8[8192]{0}', space=vmem, size = 0x2000, scoped, tag = 'output window, operand 0']
    %15 = vsyncpa [#allocation3], 0
    %s16 = scalar_lea.sflag [#allocation3], 1
    %17 = vsyncpa %s16, 0
    %18 = vsyncpa [#allocation6], 0
    %s19 = scalar_lea.sflag [#allocation6], 1
    %20 = vsyncpa %s19, 0
    %21 = vsyncpa [#allocation4], 0
    %s22 = scalar_lea.sflag [#allocation4], 1
    %23 = vsyncpa %s22, 0
    loop: start=0, step=1, limit=4
    $region2: #{tpu_custom_call.1} parent=1 // loop_pre_header
      _
    $region3: #{tpu_custom_call.1} parent=1 // loop_header
      %s25 = sphi 0, %s29
      %p26 = scmp.ge.s32.totalorder %s25, 4
      %s35 = sphi 0, %s37
      %s38 = sphi 0, %s35
      %s39 = sphi 0, %s38
      %s55 = sphi 0, %s39
      %s61 = sphi 0, %s63
      %s64 = sphi 0, %s61
      %s65 = sphi 0, %s64
      %s81 = sphi 0, %s65
      %s85 = sphi 0, %s85
      %s87 = sphi 0, %s85
      %s88 = sphi 0, %s87
      %s102 = sphi 0, %s88
      %s106 = sphi 0, %s106
      %s108 = sphi 0, %s106
      %s109 = sphi 0, %s108
      %s123 = sphi 0, %s109
      %s127 = sphi 0, %s127
      %s129 = sphi 0, %s127
      %s130 = sphi 0, %s129
      %s144 = sphi 0, %s130
      %s148 = sphi 0, %s148
      %s150 = sphi 0, %s148
      %s151 = sphi 0, %s150
      %s165 = sphi 0, %s151
      %s169 = sphi 0, %s169
      %s171 = sphi 0, %s169
      %s172 = sphi 0, %s171
      %s186 = sphi 0, %s172
      %s190 = sphi 0, %s190
      %s192 = sphi 0, %s190
      %s193 = sphi 0, %s192
      %s207 = sphi 0, %s193
      %s211 = sphi 0, %s211
      %s213 = sphi 0, %s211
      %s214 = sphi 0, %s213
      %s228 = sphi 0, %s214
      %s232 = sphi 0, %s232
      %s234 = sphi 0, %s232
      %s235 = sphi 0, %s234
      %s249 = sphi 0, %s235
      %s255 = sphi 0, %s257
      %s258 = sphi 0, %s255
      %s259 = sphi 0, %s258
      %s275 = sphi 0, %s259
    $region4: #{tpu_custom_call.1} parent=1 // loop_header_branch
      %28 = sbr.rel (%p26) target = $region8
    $region5: #{tpu_custom_call.1} parent=1 // loop_body
      %s30 = ssub.s32 %s25, 1
      %s31 = ssub.s32 %s25, 2
      %s32 = sadd.s32 %s25, 1
      %s33 = ssub.s32 %s25, %s32
      %p34 = scmp.eq.s32.totalorder %s33, 0
      %s36 = sadd.s32 %s35, 1
      %s37 = scalar_select %p34, %s35, %s36
      %p40 = pneg %p34
      %p41 = scmp.eq.s32.totalorder %s25, 1
      %p42 = por %p40, %p41
      %p43 = scmp.ne.s32.totalorder %s35, %s38
      %p44 = scmp.eq.s32.totalorder %s25, 0
      %p45 = por %p43, %p44
      %p46 = scmp.ne.s32.totalorder %s35, %s38
      %p47 = scmp.eq.s32.totalorder %s30, 1
      %p48 = por %p46, %p47
      %p49 = scmp.ne.s32.totalorder %s38, %s39
      %p50 = scmp.eq.s32.totalorder %s30, 0
      %p51 = por %p49, %p50
      %p52 = scmp.ne.s32.totalorder %s38, %s39
      %p53 = scmp.eq.s32.totalorder %s31, 1
      %p54 = por %p52, %p53
      %p56 = scmp.ne.s32.totalorder %s39, %s55
      %p57 = scmp.eq.s32.totalorder %s31, 0
      %p58 = por %p56, %p57
      %s59 = ssub.s32 %s25, %s32
      %p60 = scmp.eq.s32.totalorder %s59, 0
      %s62 = sadd.s32 %s61, 1
      %s63 = scalar_select %p60, %s61, %s62
      %p66 = pneg %p60
      %p67 = scmp.eq.s32.totalorder %s25, 1
      %p68 = por %p66, %p67
      %p69 = scmp.ne.s32.totalorder %s61, %s64
      %p70 = scmp.eq.s32.totalorder %s25, 0
      %p71 = por %p69, %p70
      %p72 = scmp.ne.s32.totalorder %s61, %s64
      %p73 = scmp.eq.s32.totalorder %s30, 1
      %p74 = por %p72, %p73
      %p75 = scmp.ne.s32.totalorder %s64, %s65
      %p76 = scmp.eq.s32.totalorder %s30, 0
      %p77 = por %p75, %p76
      %p78 = scmp.ne.s32.totalorder %s64, %s65
      %p79 = scmp.eq.s32.totalorder %s31, 1
      %p80 = por %p78, %p79
      %p82 = scmp.ne.s32.totalorder %s65, %s81
      %p83 = scmp.eq.s32.totalorder %s31, 0
      %p84 = por %p82, %p83
      %s86 = sadd.s32 %s85, 1
      %p89 = scmp.eq.s32.totalorder %s25, 1
      %p90 = scmp.ne.s32.totalorder %s85, %s87
      %p91 = scmp.eq.s32.totalorder %s25, 0
      %p92 = por %p90, %p91
      %p93 = scmp.ne.s32.totalorder %s85, %s87
      %p94 = scmp.eq.s32.totalorder %s30, 1
      %p95 = por %p93, %p94
      %p96 = scmp.ne.s32.totalorder %s87, %s88
      %p97 = scmp.eq.s32.totalorder %s30, 0
      %p98 = por %p96, %p97
      %p99 = scmp.ne.s32.totalorder %s87, %s88
      %p100 = scmp.eq.s32.totalorder %s31, 1
      %p101 = por %p99, %p100
      %p103 = scmp.ne.s32.totalorder %s88, %s102
      %p104 = scmp.eq.s32.totalorder %s31, 0
      %p105 = por %p103, %p104
      %s107 = sadd.s32 %s106, 1
      %p110 = scmp.eq.s32.totalorder %s25, 1
      %p111 = scmp.ne.s32.totalorder %s106, %s108
      %p112 = scmp.eq.s32.totalorder %s25, 0
      %p113 = por %p111, %p112
      %p114 = scmp.ne.s32.totalorder %s106, %s108
      %p115 = scmp.eq.s32.totalorder %s30, 1
      %p116 = por %p114, %p115
      %p117 = scmp.ne.s32.totalorder %s108, %s109
      %p118 = scmp.eq.s32.totalorder %s30, 0
      %p119 = por %p117, %p118
      %p120 = scmp.ne.s32.totalorder %s108, %s109
      %p121 = scmp.eq.s32.totalorder %s31, 1
      %p122 = por %p120, %p121
      %p124 = scmp.ne.s32.totalorder %s109, %s123
      %p125 = scmp.eq.s32.totalorder %s31, 0
      %p126 = por %p124, %p125
      %s128 = sadd.s32 %s127, 1
      %p131 = scmp.eq.s32.totalorder %s25, 1
      %p132 = scmp.ne.s32.totalorder %s127, %s129
      %p133 = scmp.eq.s32.totalorder %s25, 0
      %p134 = por %p132, %p133
      %p135 = scmp.ne.s32.totalorder %s127, %s129
      %p136 = scmp.eq.s32.totalorder %s30, 1
      %p137 = por %p135, %p136
      %p138 = scmp.ne.s32.totalorder %s129, %s130
      %p139 = scmp.eq.s32.totalorder %s30, 0
      %p140 = por %p138, %p139
      %p141 = scmp.ne.s32.totalorder %s129, %s130
      %p142 = scmp.eq.s32.totalorder %s31, 1
      %p143 = por %p141, %p142
      %p145 = scmp.ne.s32.totalorder %s130, %s144
      %p146 = scmp.eq.s32.totalorder %s31, 0
      %p147 = por %p145, %p146
      %s149 = sadd.s32 %s148, 1
      %p152 = scmp.eq.s32.totalorder %s25, 1
      %p153 = scmp.ne.s32.totalorder %s148, %s150
      %p154 = scmp.eq.s32.totalorder %s25, 0
      %p155 = por %p153, %p154
      %p156 = scmp.ne.s32.totalorder %s148, %s150
      %p157 = scmp.eq.s32.totalorder %s30, 1
      %p158 = por %p156, %p157
      %p159 = scmp.ne.s32.totalorder %s150, %s151
      %p160 = scmp.eq.s32.totalorder %s30, 0
      %p161 = por %p159, %p160
      %p162 = scmp.ne.s32.totalorder %s150, %s151
      %p163 = scmp.eq.s32.totalorder %s31, 1
      %p164 = por %p162, %p163
      %p166 = scmp.ne.s32.totalorder %s151, %s165
      %p167 = scmp.eq.s32.totalorder %s31, 0
      %p168 = por %p166, %p167
      %s170 = sadd.s32 %s169, 1
      %p173 = scmp.eq.s32.totalorder %s25, 1
      %p174 = scmp.ne.s32.totalorder %s169, %s171
      %p175 = scmp.eq.s32.totalorder %s25, 0
      %p176 = por %p174, %p175
      %p177 = scmp.ne.s32.totalorder %s169, %s171
      %p178 = scmp.eq.s32.totalorder %s30, 1
      %p179 = por %p177, %p178
      %p180 = scmp.ne.s32.totalorder %s171, %s172
      %p181 = scmp.eq.s32.totalorder %s30, 0
      %p182 = por %p180, %p181
      %p183 = scmp.ne.s32.totalorder %s171, %s172
      %p184 = scmp.eq.s32.totalorder %s31, 1
      %p185 = por %p183, %p184
      %p187 = scmp.ne.s32.totalorder %s172, %s186
      %p188 = scmp.eq.s32.totalorder %s31, 0
      %p189 = por %p187, %p188
      %s191 = sadd.s32 %s190, 1
      %p194 = scmp.eq.s32.totalorder %s25, 1
      %p195 = scmp.ne.s32.totalorder %s190, %s192
      %p196 = scmp.eq.s32.totalorder %s25, 0
      %p197 = por %p195, %p196
      %p198 = scmp.ne.s32.totalorder %s190, %s192
      %p199 = scmp.eq.s32.totalorder %s30, 1
      %p200 = por %p198, %p199
      %p201 = scmp.ne.s32.totalorder %s192, %s193
      %p202 = scmp.eq.s32.totalorder %s30, 0
      %p203 = por %p201, %p202
      %p204 = scmp.ne.s32.totalorder %s192, %s193
      %p205 = scmp.eq.s32.totalorder %s31, 1
      %p206 = por %p204, %p205
      %p208 = scmp.ne.s32.totalorder %s193, %s207
      %p209 = scmp.eq.s32.totalorder %s31, 0
      %p210 = por %p208, %p209
      %s212 = sadd.s32 %s211, 1
      %p215 = scmp.eq.s32.totalorder %s25, 1
      %p216 = scmp.ne.s32.totalorder %s211, %s213
      %p217 = scmp.eq.s32.totalorder %s25, 0
      %p218 = por %p216, %p217
      %p219 = scmp.ne.s32.totalorder %s211, %s213
      %p220 = scmp.eq.s32.totalorder %s30, 1
      %p221 = por %p219, %p220
      %p222 = scmp.ne.s32.totalorder %s213, %s214
      %p223 = scmp.eq.s32.totalorder %s30, 0
      %p224 = por %p222, %p223
      %p225 = scmp.ne.s32.totalorder %s213, %s214
      %p226 = scmp.eq.s32.totalorder %s31, 1
      %p227 = por %p225, %p226
      %p229 = scmp.ne.s32.totalorder %s214, %s228
      %p230 = scmp.eq.s32.totalorder %s31, 0
      %p231 = por %p229, %p230
      %s233 = sadd.s32 %s232, 1
      %p236 = scmp.eq.s32.totalorder %s25, 1
      %p237 = scmp.ne.s32.totalorder %s232, %s234
      %p238 = scmp.eq.s32.totalorder %s25, 0
      %p239 = por %p237, %p238
      %p240 = scmp.ne.s32.totalorder %s232, %s234
      %p241 = scmp.eq.s32.totalorder %s30, 1
      %p242 = por %p240, %p241
      %p243 = scmp.ne.s32.totalorder %s234, %s235
      %p244 = scmp.eq.s32.totalorder %s30, 0
      %p245 = por %p243, %p244
      %p246 = scmp.ne.s32.totalorder %s234, %s235
      %p247 = scmp.eq.s32.totalorder %s31, 1
      %p248 = por %p246, %p247
      %p250 = scmp.ne.s32.totalorder %s235, %s249
      %p251 = scmp.eq.s32.totalorder %s31, 0
      %p252 = por %p250, %p251
      %s253 = ssub.s32 %s25, %s32
      %p254 = scmp.eq.s32.totalorder %s253, 0
      %s256 = sadd.s32 %s255, 1
      %s257 = scalar_select %p254, %s255, %s256
      %p260 = pneg %p254
      %p261 = scmp.eq.s32.totalorder %s25, 1
      %p262 = por %p260, %p261
      %p263 = scmp.ne.s32.totalorder %s255, %s258
      %p264 = scmp.eq.s32.totalorder %s25, 0
      %p265 = por %p263, %p264
      %p266 = scmp.ne.s32.totalorder %s255, %s258
      %p267 = scmp.eq.s32.totalorder %s30, 1
      %p268 = por %p266, %p267
      %p269 = scmp.ne.s32.totalorder %s258, %s259
      %p270 = scmp.eq.s32.totalorder %s30, 0
      %p271 = por %p269, %p270
      %p272 = scmp.ne.s32.totalorder %s258, %s259
      %p273 = scmp.eq.s32.totalorder %s31, 1
      %p274 = por %p272, %p273
      %p276 = scmp.ne.s32.totalorder %s259, %s275
      %p277 = scmp.eq.s32.totalorder %s31, 0
      %p278 = por %p276, %p277
      %p279 = scmp.le.s32.totalorder 1, %s25
      %p280 = scmp.lt.s32.totalorder %s25, 3
      %p281 = pnand %p279, %p280
      %p282 = pneg %p281
      // Predicated region
      $region9: #{tpu_custom_call.1} parent=5 // pred_check
        _
      $region10: #{tpu_custom_call.1} parent=5 // pred_check_branch
        %284 = sbr.rel (%p281) target = $region12
      $region11: #{tpu_custom_call.1} parent=5 // pred_region
        %s285 = ssub.s32 %s25, 1
        // Predicated region
        $region13: #{tpu_custom_call.1} parent=11 // pred_check
          %p286 = pneg %p98
        $region14: #{tpu_custom_call.1} parent=11 // pred_check_branch
          %288 = sbr.rel (%p286) target = $region16
        $region15: #{tpu_custom_call.1} parent=11 // pred_region
          _
        $region16: #{tpu_custom_call.1} parent=11 // pred_fallthru
          _
        // Predicated region
        $region17: #{tpu_custom_call.1} parent=11 // pred_check
          %p289 = pneg %p119
        $region18: #{tpu_custom_call.1} parent=11 // pred_check_branch
          %291 = sbr.rel (%p289) target = $region20
        $region19: #{tpu_custom_call.1} parent=11 // pred_region
          _
        $region20: #{tpu_custom_call.1} parent=11 // pred_fallthru
          _
        // Predicated region
        $region21: #{tpu_custom_call.1} parent=11 // pred_check
          %p292 = pneg %p140
        $region22: #{tpu_custom_call.1} parent=11 // pred_check_branch
          %294 = sbr.rel (%p292) target = $region24
        $region23: #{tpu_custom_call.1} parent=11 // pred_region
          _
        $region24: #{tpu_custom_call.1} parent=11 // pred_fallthru
          _
        // Predicated region
        $region25: #{tpu_custom_call.1} parent=11 // pred_check
          %p295 = pneg %p161
        $region26: #{tpu_custom_call.1} parent=11 // pred_check_branch
          %297 = sbr.rel (%p295) target = $region28
        $region27: #{tpu_custom_call.1} parent=11 // pred_region
          _
        $region28: #{tpu_custom_call.1} parent=11 // pred_fallthru
          _
        // Predicated region
        $region29: #{tpu_custom_call.1} parent=11 // pred_check
          %p298 = pneg %p182
        $region30: #{tpu_custom_call.1} parent=11 // pred_check_branch
          %300 = sbr.rel (%p298) target = $region32
        $region31: #{tpu_custom_call.1} parent=11 // pred_region
          _
        $region32: #{tpu_custom_call.1} parent=11 // pred_fallthru
          _
        // Predicated region
        $region33: #{tpu_custom_call.1} parent=11 // pred_check
          %p301 = pneg %p203
        $region34: #{tpu_custom_call.1} parent=11 // pred_check_branch
          %303 = sbr.rel (%p301) target = $region36
        $region35: #{tpu_custom_call.1} parent=11 // pred_region
          _
        $region36: #{tpu_custom_call.1} parent=11 // pred_fallthru
          _
        // Predicated region
        $region37: #{tpu_custom_call.1} parent=11 // pred_check
          %p304 = pneg %p224
        $region38: #{tpu_custom_call.1} parent=11 // pred_check_branch
          %306 = sbr.rel (%p304) target = $region40
        $region39: #{tpu_custom_call.1} parent=11 // pred_region
          _
        $region40: #{tpu_custom_call.1} parent=11 // pred_fallthru
          _
        // Predicated region
        $region41: #{tpu_custom_call.1} parent=11 // pred_check
          %p307 = pneg %p245
        $region42: #{tpu_custom_call.1} parent=11 // pred_check_branch
          %309 = sbr.rel (%p307) target = $region44
        $region43: #{tpu_custom_call.1} parent=11 // pred_region
          _
        $region44: #{tpu_custom_call.1} parent=11 // pred_fallthru
          _
      $region12: #{tpu_custom_call.1} parent=5 // pred_fallthru
        _
      %p310 = scmp.lt.s32.totalorder %s25, 2
      // Predicated region
      $region45: #{tpu_custom_call.1} parent=5 // pred_check
        %p311 = pneg %p310
      $region46: #{tpu_custom_call.1} parent=5 // pred_check_branch
        %313 = sbr.rel (%p311) target = $region48
      $region47: #{tpu_custom_call.1} parent=5 // pred_region
        // Predicated region
        $region49: #{tpu_custom_call.1} parent=47 // pred_check
          %p314 = pneg %p45
        $region50: #{tpu_custom_call.1} parent=47 // pred_check_branch
          %316 = sbr.rel (%p314) target = $region52
        $region51: #{tpu_custom_call.1} parent=47 // pred_region
          %s317 = sand.u32 %s35, 1
          %s318 = scalar_lea.sflag [#allocation3], %s317
          %s319 = sand.u32 %s35, 1
          %s320 = smul.addr %s319, 8
          %s321 = scalar_lea.vmem [#allocation2], %s320
          %s323 = ssub.s32 128, 128
          %324 = vsyncadd %s318, %s323
          %s325 = smul.addr %s25, 128
          %s326 = scalar_lea.hbm %s0, %s325
          %s328 = sshll.u32 %s321, 4
          %s329 = int_to_ptr.vmem [resolvable:$true] %s328
          %331 = dma.hbm_to_vmem [thread:$0]  %s326, 128, %s329, %s318
        $region52: #{tpu_custom_call.1} parent=47 // pred_fallthru
          _
        // Predicated region
        $region53: #{tpu_custom_call.1} parent=47 // pred_check
          %p332 = pneg %p71
        $region54: #{tpu_custom_call.1} parent=47 // pred_check_branch
          %334 = sbr.rel (%p332) target = $region56
        $region55: #{tpu_custom_call.1} parent=47 // pred_region
          %s335 = sand.u32 %s61, 1
          %s336 = scalar_lea.sflag [#allocation6], %s335
          %s337 = sand.u32 %s61, 1
          %s338 = smul.addr %s337, 8
          %s339 = scalar_lea.vmem [#allocation5], %s338
          %s341 = ssub.s32 128, 128
          %342 = vsyncadd %s336, %s341
          %s343 = smul.addr %s25, 128
          %s344 = scalar_lea.hbm %s1, %s343
          %s346 = sshll.u32 %s339, 4
          %s347 = int_to_ptr.vmem [resolvable:$true] %s346
          %349 = dma.hbm_to_vmem [thread:$0]  %s344, 128, %s347, %s336
        $region56: #{tpu_custom_call.1} parent=47 // pred_fallthru
          _
      $region48: #{tpu_custom_call.1} parent=5 // pred_fallthru
        _
      %p350 = scmp.le.s32.totalorder 1, %s25
      %p351 = scmp.lt.s32.totalorder %s25, 3
      %p352 = pnand %p350, %p351
      %p353 = pneg %p352
      // Predicated region
      $region57: #{tpu_custom_call.1} parent=5 // pred_check
        _
      $region58: #{tpu_custom_call.1} parent=5 // pred_check_branch
        %355 = sbr.rel (%p352) target = $region60
      $region59: #{tpu_custom_call.1} parent=5 // pred_region
        %s356 = ssub.s32 %s25, 1
        %s357 = sand.u32 %s38, 1
        %s358 = scalar_lea.sflag [#allocation3], %s357
        %s359 = sand.u32 %s38, 1
        %s360 = smul.addr %s359, 8
        %s361 = scalar_lea.vmem [#allocation2], %s360
        // Predicated region
        $region61: #{tpu_custom_call.1} parent=59 // pred_check
          %p362 = pneg %p51
        $region62: #{tpu_custom_call.1} parent=59 // pred_check_branch
          %364 = sbr.rel (%p362) target = $region64
        $region63: #{tpu_custom_call.1} parent=59 // pred_region
          %365 = dma.done %s358, 128
        $region64: #{tpu_custom_call.1} parent=59 // pred_fallthru
          _
        %s366 = sand.u32 %s64, 1
        %s367 = scalar_lea.sflag [#allocation6], %s366
        %s368 = sand.u32 %s64, 1
        %s369 = smul.addr %s368, 8
        %s370 = scalar_lea.vmem [#allocation5], %s369
        // Predicated region
        $region65: #{tpu_custom_call.1} parent=59 // pred_check
          %p371 = pneg %p77
        $region66: #{tpu_custom_call.1} parent=59 // pred_check_branch
          %373 = sbr.rel (%p371) target = $region68
        $region67: #{tpu_custom_call.1} parent=59 // pred_region
          %374 = dma.done %s367, 128
        $region68: #{tpu_custom_call.1} parent=59 // pred_fallthru
          _
        %s375 = sand.u32 %s38, 1
        %s376 = scalar_lea.sflag [#allocation3], %s375
        %s377 = sand.u32 %s38, 1
        %s378 = smul.addr %s377, 8
        %s379 = scalar_lea.vmem [#allocation2], %s378
        %p380 = pneg %p51
        %p381 = pneg %p48
        %s382 = sand.u32 %s64, 1
        %s383 = scalar_lea.sflag [#allocation6], %s382
        %s384 = sand.u32 %s64, 1
        %s385 = smul.addr %s384, 8
        %s386 = scalar_lea.vmem [#allocation5], %s385
        %p387 = pneg %p77
        %p388 = pneg %p74
        %p389 = pneg %p98
        %p390 = pneg %p95
        %p391 = pneg %p119
        %p392 = pneg %p116
        %p393 = pneg %p140
        %p394 = pneg %p137
        %p395 = pneg %p161
        %p396 = pneg %p158
        %p397 = pneg %p182
        %p398 = pneg %p179
        %p399 = pneg %p203
        %p400 = pneg %p200
        %p401 = pneg %p224
        %p402 = pneg %p221
        %p403 = pneg %p245
        %p404 = pneg %p242
        %p405 = pneg %p271
        %p406 = pneg %p268
        %s407 = sand.u32 %s258, 1
        %s408 = scalar_lea.sflag [#allocation4], %s407
        %s409 = sand.u32 %s258, 1
        %s410 = smul.addr %s409, 8
        %s411 = scalar_lea.vmem [#allocation7], %s410
        %v412 = vld [vmem:[%s361] sm:$0xff]
        %v413 = vld [vmem:[%s2] sm:$0xff]
        %v414 = vld [vmem:[%s2 + $0x8] sm:$0xff]
        %v415 = vld [vmem:[%s2 + $0x10] sm:$0xff]
        %v416 = vld [vmem:[%s2 + $0x18] sm:$0xff]
        %v417 = vld [vmem:[%s370] sm:$0xff]
        %vm418 = vcmask 261120
        %v420 = vsel %vm418, %v417, 0
        %422 = vmatprep.subr.mxu0 0.0
        %423 = vmatpush1.msra.mxu0 %v413
        %424 = vmatprep.subr.mxu0 0.0
        %425 = vmatpush1.msra.mxu0 %v414
        %426 = vmatprep.subr.mxu0 0.0
        %427 = vmatpush1.msra.mxu0 %v415
        %428 = vmatprep.subr.mxu0 0.0
        %429 = vmatpush1.msra.mxu0 %v416
        %430 = vmatprep.subr.mxu0 0.0
        %431 = vmatpush1.msra.mxu0 0.0
        %432 = vmatprep.subr.mxu0 0.0
        %433 = vmatpush1.msra.mxu0 0.0
        %434 = vmatprep.subr.mxu0 0.0
        %435 = vmatpush1.msra.mxu0 0.0
        %436 = vmatprep.subr.mxu0 0.0
        %437 = vmatpush1.msra.mxu0 0.0
        %438 = vmatprep.subr.mxu0 0.0
        %439 = vmatpush1.msra.mxu0 0.0
        %440 = vmatprep.subr.mxu0 0.0
        %441 = vmatpush1.msra.mxu0 0.0
        %442 = vmatprep.subr.mxu0 0.0
        %443 = vmatpush1.msra.mxu0 0.0
        %444 = vmatprep.subr.mxu0 0.0
        %445 = vmatpush1.msra.mxu0 0.0
        %446 = vmatprep.subr.mxu0 0.0
        %447 = vmatpush1.msra.mxu0 0.0
        %448 = vmatprep.subr.mxu0 0.0
        %449 = vmatpush1.msra.mxu0 0.0
        %450 = vmatprep.subr.mxu0 0.0
        %451 = vmatpush1.msra.mxu0 0.0
        %452 = vmatprep.subr.mxu0 0.0
        %453 = vmatpush1.msra.mxu0 0.0
        %454 = vmatprep.subr.mxu0 0.0
        %455 = vmatpush1.msra.mxu0 0.0
        %456 = vmatprep.subr.mxu0 0.0
        %457 = vmatpush1.msra.mxu0 0.0
        %458 = vmatprep.subr.mxu0 0.0
        %459 = vmatpush1.msra.mxu0 0.0
        %460 = vmatprep.subr.mxu0 0.0
        %461 = vmatpush1.msra.mxu0 0.0
        %462 = vmatprep.subr.mxu0 0.0
        %463 = vmatpush1.msra.mxu0 0.0
        %464 = vmatprep.subr.mxu0 0.0
        %465 = vmatpush1.msra.mxu0 0.0
        %466 = vmatprep.subr.mxu0 0.0
        %467 = vmatpush1.msra.mxu0 0.0
        %468 = vmatprep.subr.mxu0 0.0
        %469 = vmatpush1.msra.mxu0 0.0
        %470 = vmatprep.subr.mxu0 0.0
        %471 = vmatpush1.msra.mxu0 0.0
        %472 = vmatprep.subr.mxu0 0.0
        %473 = vmatpush1.msra.mxu0 0.0
        %474 = vmatprep.subr.mxu0 0.0
        %475 = vmatpush1.msra.mxu0 0.0
        %476 = vmatprep.subr.mxu0 0.0
        %477 = vmatpush1.msra.mxu0 0.0
        %478 = vmatprep.subr.mxu0 0.0
        %479 = vmatpush1.msra.mxu0 0.0
        %480 = vmatprep.subr.mxu0 0.0
        %481 = vmatpush1.msra.mxu0 0.0
        %482 = vmatprep.subr.mxu0 0.0
        %483 = vmatpush1.msra.mxu0 0.0
        %484 = vmatprep.subr.mxu0 0.0
        %485 = vmatpush1.msra.mxu0 0.0
        %486 = vmatprep.mubr.f32.mxu0 0.0
        %487 = vmatmul.mubr.f32.gmra.mrb[0].mxu0 %v420
        %v488 = vpop.f32.mrb[0].mxu0
        %v489 = vadd.f32 0.0, %v488
        %v490 = vpop.f32.mrb[0].mxu0
        %491 = vdwg.mxu0
        %v492 = vmul.f32 %v489, %v489
        %v493 = vadd.f32 %v492, 0.0
        %494 = vrot.lane.b32.xlu0 %v417, 96
        %v495 = vpop.permute.xlu0 %494
        %v496 = vsel %vm418, %v495, 0
        %498 = vmatprep.subr.mxu0 0.0
        %499 = vmatpush1.msra.mxu0 %v413
        %500 = vmatprep.subr.mxu0 0.0
        %501 = vmatpush1.msra.mxu0 %v414
        %502 = vmatprep.subr.mxu0 0.0
        %503 = vmatpush1.msra.mxu0 %v415
        %504 = vmatprep.subr.mxu0 0.0
        %505 = vmatpush1.msra.mxu0 %v416
        %506 = vmatprep.subr.mxu0 0.0
        %507 = vmatpush1.msra.mxu0 0.0
        %508 = vmatprep.subr.mxu0 0.0
        %509 = vmatpush1.msra.mxu0 0.0
        %510 = vmatprep.subr.mxu0 0.0
        %511 = vmatpush1.msra.mxu0 0.0
        %512 = vmatprep.subr.mxu0 0.0
        %513 = vmatpush1.msra.mxu0 0.0
        %514 = vmatprep.subr.mxu0 0.0
        %515 = vmatpush1.msra.mxu0 0.0
        %516 = vmatprep.subr.mxu0 0.0
        %517 = vmatpush1.msra.mxu0 0.0
        %518 = vmatprep.subr.mxu0 0.0
        %519 = vmatpush1.msra.mxu0 0.0
        %520 = vmatprep.subr.mxu0 0.0
        %521 = vmatpush1.msra.mxu0 0.0
        %522 = vmatprep.subr.mxu0 0.0
        %523 = vmatpush1.msra.mxu0 0.0
        %524 = vmatprep.subr.mxu0 0.0
        %525 = vmatpush1.msra.mxu0 0.0
        %526 = vmatprep.subr.mxu0 0.0
        %527 = vmatpush1.msra.mxu0 0.0
        %528 = vmatprep.subr.mxu0 0.0
        %529 = vmatpush1.msra.mxu0 0.0
        %530 = vmatprep.subr.mxu0 0.0
        %531 = vmatpush1.msra.mxu0 0.0
        %532 = vmatprep.subr.mxu0 0.0
        %533 = vmatpush1.msra.mxu0 0.0
        %534 = vmatprep.subr.mxu0 0.0
        %535 = vmatpush1.msra.mxu0 0.0
        %536 = vmatprep.subr.mxu0 0.0
        %537 = vmatpush1.msra.mxu0 0.0
        %538 = vmatprep.subr.mxu0 0.0
        %539 = vmatpush1.msra.mxu0 0.0
        %540 = vmatprep.subr.mxu0 0.0
        %541 = vmatpush1.msra.mxu0 0.0
        %542 = vmatprep.subr.mxu0 0.0
        %543 = vmatpush1.msra.mxu0 0.0
        %544 = vmatprep.subr.mxu0 0.0
        %545 = vmatpush1.msra.mxu0 0.0
        %546 = vmatprep.subr.mxu0 0.0
        %547 = vmatpush1.msra.mxu0 0.0
        %548 = vmatprep.subr.mxu0 0.0
        %549 = vmatpush1.msra.mxu0 0.0
        %550 = vmatprep.subr.mxu0 0.0
        %551 = vmatpush1.msra.mxu0 0.0
        %552 = vmatprep.subr.mxu0 0.0
        %553 = vmatpush1.msra.mxu0 0.0
        %554 = vmatprep.subr.mxu0 0.0
        %555 = vmatpush1.msra.mxu0 0.0
        %556 = vmatprep.subr.mxu0 0.0
        %557 = vmatpush1.msra.mxu0 0.0
        %558 = vmatprep.subr.mxu0 0.0
        %559 = vmatpush1.msra.mxu0 0.0
        %560 = vmatprep.subr.mxu0 0.0
        %561 = vmatpush1.msra.mxu0 0.0
        %562 = vmatprep.mubr.f32.mxu0 0.0
        %563 = vmatmul.mubr.f32.gmra.mrb[0].mxu0 %v496
        %v564 = vpop.f32.mrb[0].mxu0
        %v565 = vadd.f32 0.0, %v564
        %v566 = vpop.f32.mrb[0].mxu0
        %567 = vdwg.mxu0
        %v568 = vmul.f32 %v565, %v565
        %v569 = vadd.f32 %v493, %v568
        %570 = vrot.lane.b32.xlu0 %v417, 64
        %v571 = vpop.permute.xlu0 %570
        %v572 = vsel %vm418, %v571, 0
        %574 = vmatprep.subr.mxu0 0.0
        %575 = vmatpush1.msra.mxu0 %v413
        %576 = vmatprep.subr.mxu0 0.0
        %577 = vmatpush1.msra.mxu0 %v414
        %578 = vmatprep.subr.mxu0 0.0
        %579 = vmatpush1.msra.mxu0 %v415
        %580 = vmatprep.subr.mxu0 0.0
        %581 = vmatpush1.msra.mxu0 %v416
        %582 = vmatprep.subr.mxu0 0.0
        %583 = vmatpush1.msra.mxu0 0.0
        %584 = vmatprep.subr.mxu0 0.0
        %585 = vmatpush1.msra.mxu0 0.0
        %586 = vmatprep.subr.mxu0 0.0
        %587 = vmatpush1.msra.mxu0 0.0
        %588 = vmatprep.subr.mxu0 0.0
        %589 = vmatpush1.msra.mxu0 0.0
        %590 = vmatprep.subr.mxu0 0.0
        %591 = vmatpush1.msra.mxu0 0.0
        %592 = vmatprep.subr.mxu0 0.0
        %593 = vmatpush1.msra.mxu0 0.0
        %594 = vmatprep.subr.mxu0 0.0
        %595 = vmatpush1.msra.mxu0 0.0
        %596 = vmatprep.subr.mxu0 0.0
        %597 = vmatpush1.msra.mxu0 0.0
        %598 = vmatprep.subr.mxu0 0.0
        %599 = vmatpush1.msra.mxu0 0.0
        %600 = vmatprep.subr.mxu0 0.0
        %601 = vmatpush1.msra.mxu0 0.0
        %602 = vmatprep.subr.mxu0 0.0
        %603 = vmatpush1.msra.mxu0 0.0
        %604 = vmatprep.subr.mxu0 0.0
        %605 = vmatpush1.msra.mxu0 0.0
        %606 = vmatprep.subr.mxu0 0.0
        %607 = vmatpush1.msra.mxu0 0.0
        %608 = vmatprep.subr.mxu0 0.0
        %609 = vmatpush1.msra.mxu0 0.0
        %610 = vmatprep.subr.mxu0 0.0
        %611 = vmatpush1.msra.mxu0 0.0
        %612 = vmatprep.subr.mxu0 0.0
        %613 = vmatpush1.msra.mxu0 0.0
        %614 = vmatprep.subr.mxu0 0.0
        %615 = vmatpush1.msra.mxu0 0.0
        %616 = vmatprep.subr.mxu0 0.0
        %617 = vmatpush1.msra.mxu0 0.0
        %618 = vmatprep.subr.mxu0 0.0
        %619 = vmatpush1.msra.mxu0 0.0
        %620 = vmatprep.subr.mxu0 0.0
        %621 = vmatpush1.msra.mxu0 0.0
        %622 = vmatprep.subr.mxu0 0.0
        %623 = vmatpush1.msra.mxu0 0.0
        %624 = vmatprep.subr.mxu0 0.0
        %625 = vmatpush1.msra.mxu0 0.0
        %626 = vmatprep.subr.mxu0 0.0
        %627 = vmatpush1.msra.mxu0 0.0
        %628 = vmatprep.subr.mxu0 0.0
        %629 = vmatpush1.msra.mxu0 0.0
        %630 = vmatprep.subr.mxu0 0.0
        %631 = vmatpush1.msra.mxu0 0.0
        %632 = vmatprep.subr.mxu0 0.0
        %633 = vmatpush1.msra.mxu0 0.0
        %634 = vmatprep.subr.mxu0 0.0
        %635 = vmatpush1.msra.mxu0 0.0
        %636 = vmatprep.subr.mxu0 0.0
        %637 = vmatpush1.msra.mxu0 0.0
        %638 = vmatprep.mubr.f32.mxu0 0.0
        %639 = vmatmul.mubr.f32.gmra.mrb[0].mxu0 %v572
        %v640 = vpop.f32.mrb[0].mxu0
        %v641 = vadd.f32 0.0, %v640
        %v642 = vpop.f32.mrb[0].mxu0
        %643 = vdwg.mxu0
        %v644 = vmul.f32 %v641, %v641
        %v645 = vadd.f32 %v569, %v644
        %v646 = vrsqrt.pop %v645
        %v647 = vmul.f32 %v645, %v646
        %vm648 = vcmp.eq.f32.partialorder %v645, inf
        %v649 = vsel %vm648, %v645, %v647
        %vm650 = vcmp.eq.f32.partialorder %v645, 0.0
        %v651 = vand.u32 %v645, 2147483648
        %v652 = vsel %vm650, %v651, %v649
        %v653 = vld [vmem:[%s3] sm:$0xff]
        %v654 = vld [vmem:[%s3 + $0x8] sm:$0xff]
        %v655 = vld [vmem:[%s3 + $0x10] sm:$0xff]
        %v656 = vld [vmem:[%s3 + $0x18] sm:$0xff]
        %v657 = vld [vmem:[%s4] sm:$0xff]
        %v658 = vld [vmem:[%s4 + $0x8] sm:$0xff]
        %v659 = vld [vmem:[%s4 + $0x10] sm:$0xff]
        %v660 = vld [vmem:[%s4 + $0x18] sm:$0xff]
        %v662 = vsel %vm418, %v652, 0
        %664 = vmatprep.subr.mxu0 0.0
        %665 = vmatpush1.msra.mxu0 %v657
        %666 = vmatprep.subr.mxu0 0.0
        %667 = vmatpush1.msra.mxu0 %v658
        %668 = vmatprep.subr.mxu0 0.0
        %669 = vmatpush1.msra.mxu0 %v659
        %670 = vmatprep.subr.mxu0 0.0
        %671 = vmatpush1.msra.mxu0 %v660
        %672 = vmatprep.subr.mxu0 0.0
        %673 = vmatpush1.msra.mxu0 0.0
        %674 = vmatprep.subr.mxu0 0.0
        %675 = vmatpush1.msra.mxu0 0.0
        %676 = vmatprep.subr.mxu0 0.0
        %677 = vmatpush1.msra.mxu0 0.0
        %678 = vmatprep.subr.mxu0 0.0
        %679 = vmatpush1.msra.mxu0 0.0
        %680 = vmatprep.subr.mxu0 0.0
        %681 = vmatpush1.msra.mxu0 0.0
        %682 = vmatprep.subr.mxu0 0.0
        %683 = vmatpush1.msra.mxu0 0.0
        %684 = vmatprep.subr.mxu0 0.0
        %685 = vmatpush1.msra.mxu0 0.0
        %686 = vmatprep.subr.mxu0 0.0
        %687 = vmatpush1.msra.mxu0 0.0
        %688 = vmatprep.subr.mxu0 0.0
        %689 = vmatpush1.msra.mxu0 0.0
        %690 = vmatprep.subr.mxu0 0.0
        %691 = vmatpush1.msra.mxu0 0.0
        %692 = vmatprep.subr.mxu0 0.0
        %693 = vmatpush1.msra.mxu0 0.0
        %694 = vmatprep.subr.mxu0 0.0
        %695 = vmatpush1.msra.mxu0 0.0
        %696 = vmatprep.subr.mxu0 0.0
        %697 = vmatpush1.msra.mxu0 0.0
        %698 = vmatprep.subr.mxu0 0.0
        %699 = vmatpush1.msra.mxu0 0.0
        %700 = vmatprep.subr.mxu0 0.0
        %701 = vmatpush1.msra.mxu0 0.0
        %702 = vmatprep.subr.mxu0 0.0
        %703 = vmatpush1.msra.mxu0 0.0
        %704 = vmatprep.subr.mxu0 0.0
        %705 = vmatpush1.msra.mxu0 0.0
        %706 = vmatprep.subr.mxu0 0.0
        %707 = vmatpush1.msra.mxu0 0.0
        %708 = vmatprep.subr.mxu0 0.0
        %709 = vmatpush1.msra.mxu0 0.0
        %710 = vmatprep.subr.mxu0 0.0
        %711 = vmatpush1.msra.mxu0 0.0
        %712 = vmatprep.subr.mxu0 0.0
        %713 = vmatpush1.msra.mxu0 0.0
        %714 = vmatprep.subr.mxu0 0.0
        %715 = vmatpush1.msra.mxu0 0.0
        %716 = vmatprep.subr.mxu0 0.0
        %717 = vmatpush1.msra.mxu0 0.0
        %718 = vmatprep.subr.mxu0 0.0
        %719 = vmatpush1.msra.mxu0 0.0
        %720 = vmatprep.subr.mxu0 0.0
        %721 = vmatpush1.msra.mxu0 0.0
        %722 = vmatprep.subr.mxu0 0.0
        %723 = vmatpush1.msra.mxu0 0.0
        %724 = vmatprep.subr.mxu0 0.0
        %725 = vmatpush1.msra.mxu0 0.0
        %726 = vmatprep.subr.mxu0 0.0
        %727 = vmatpush1.msra.mxu0 0.0
        %728 = vmatprep.mubr.f32.mxu0 0.0
        %729 = vmatmul.mubr.f32.gmra.mrb[0].mxu0 %v662
        %v730 = vpop.f32.mrb[0].mxu0
        %v731 = vadd.f32 0.0, %v730
        %v732 = vpop.f32.mrb[0].mxu0
        %733 = vdwg.mxu0
        %v735 = vsel %vm418, %v412, 0
        %737 = vmatprep.subr.mxu0 0.0
        %738 = vmatpush1.msra.mxu0 %v653
        %739 = vmatprep.subr.mxu0 0.0
        %740 = vmatpush1.msra.mxu0 %v654
        %741 = vmatprep.subr.mxu0 0.0
        %742 = vmatpush1.msra.mxu0 %v655
        %743 = vmatprep.subr.mxu0 0.0
        %744 = vmatpush1.msra.mxu0 %v656
        %745 = vmatprep.subr.mxu0 0.0
        %746 = vmatpush1.msra.mxu0 0.0
        %747 = vmatprep.subr.mxu0 0.0
        %748 = vmatpush1.msra.mxu0 0.0
        %749 = vmatprep.subr.mxu0 0.0
        %750 = vmatpush1.msra.mxu0 0.0
        %751 = vmatprep.subr.mxu0 0.0
        %752 = vmatpush1.msra.mxu0 0.0
        %753 = vmatprep.subr.mxu0 0.0
        %754 = vmatpush1.msra.mxu0 0.0
        %755 = vmatprep.subr.mxu0 0.0
        %756 = vmatpush1.msra.mxu0 0.0
        %757 = vmatprep.subr.mxu0 0.0
        %758 = vmatpush1.msra.mxu0 0.0
        %759 = vmatprep.subr.mxu0 0.0
        %760 = vmatpush1.msra.mxu0 0.0
        %761 = vmatprep.subr.mxu0 0.0
        %762 = vmatpush1.msra.mxu0 0.0
        %763 = vmatprep.subr.mxu0 0.0
        %764 = vmatpush1.msra.mxu0 0.0
        %765 = vmatprep.subr.mxu0 0.0
        %766 = vmatpush1.msra.mxu0 0.0
        %767 = vmatprep.subr.mxu0 0.0
        %768 = vmatpush1.msra.mxu0 0.0
        %769 = vmatprep.subr.mxu0 0.0
        %770 = vmatpush1.msra.mxu0 0.0
        %771 = vmatprep.subr.mxu0 0.0
        %772 = vmatpush1.msra.mxu0 0.0
        %773 = vmatprep.subr.mxu0 0.0
        %774 = vmatpush1.msra.mxu0 0.0
        %775 = vmatprep.subr.mxu0 0.0
        %776 = vmatpush1.msra.mxu0 0.0
        %777 = vmatprep.subr.mxu0 0.0
        %778 = vmatpush1.msra.mxu0 0.0
        %779 = vmatprep.subr.mxu0 0.0
        %780 = vmatpush1.msra.mxu0 0.0
        %781 = vmatprep.subr.mxu0 0.0
        %782 = vmatpush1.msra.mxu0 0.0
        %783 = vmatprep.subr.mxu0 0.0
        %784 = vmatpush1.msra.mxu0 0.0
        %785 = vmatprep.subr.mxu0 0.0
        %786 = vmatpush1.msra.mxu0 0.0
        %787 = vmatprep.subr.mxu0 0.0
        %788 = vmatpush1.msra.mxu0 0.0
        %789 = vmatprep.subr.mxu0 0.0
        %790 = vmatpush1.msra.mxu0 0.0
        %791 = vmatprep.subr.mxu0 0.0
        %792 = vmatpush1.msra.mxu0 0.0
        %793 = vmatprep.subr.mxu0 0.0
        %794 = vmatpush1.msra.mxu0 0.0
        %795 = vmatprep.subr.mxu0 0.0
        %796 = vmatpush1.msra.mxu0 0.0
        %797 = vmatprep.subr.mxu0 0.0
        %798 = vmatpush1.msra.mxu0 0.0
        %799 = vmatprep.subr.mxu0 0.0
        %800 = vmatpush1.msra.mxu0 0.0
        %801 = vmatprep.mubr.f32.mxu0 0.0
        %802 = vmatmul.mubr.f32.gmra.mrb[0].mxu0 %v735
        %v803 = vpop.f32.mrb[0].mxu0
        %v804 = vadd.f32 %v731, %v803
        %v805 = vpop.f32.mrb[0].mxu0
        %806 = vdwg.mxu0
        %v807 = vld [vmem:[%s5] sm:$0x1]
        %v809 = vlaneseq
        %v810 = vshrl.u32 %v809, 7
        %v811 = vsub.s32 0, %v810
        %v812 = vrot.slane %v807, %v811
        %v814 = vadd.f32 %v804, %v812
        %v815 = vxor.u32 %v814, 2147483648
        %v816 = vmul.f32 %v815, 1.442695
        %v817 = vpow.pop %v816
        %v818 = vadd.f32 %v817, 1.0
        %v819 = vrcp.pop %v818
        %v820 = vmul.f32 1.0, %v819
        %v821 = vmul.f32 %v814, %v820
        %v822 = vld [vmem:[%s6] sm:$0xff]
        %v823 = vld [vmem:[%s6 + $0x8] sm:$0xff]
        %v824 = vld [vmem:[%s6 + $0x10] sm:$0xff]
        %v825 = vld [vmem:[%s6 + $0x18] sm:$0xff]
        %v826 = vld [vmem:[%s8] sm:$0x1]
        %v828 = vlaneseq
        %v829 = vshrl.u32 %v828, 7
        %v830 = vsub.s32 0, %v829
        %v831 = vrot.slane %v826, %v830
        %v834 = vsel %vm418, %v821, 0
        %836 = vmatprep.subr.mxu0 0.0
        %837 = vmatpush1.msra.mxu0 %v822
        %838 = vmatprep.subr.mxu0 0.0
        %839 = vmatpush1.msra.mxu0 %v823
        %840 = vmatprep.subr.mxu0 0.0
        %841 = vmatpush1.msra.mxu0 %v824
        %842 = vmatprep.subr.mxu0 0.0
        %843 = vmatpush1.msra.mxu0 %v825
        %844 = vmatprep.subr.mxu0 0.0
        %845 = vmatpush1.msra.mxu0 0.0
        %846 = vmatprep.subr.mxu0 0.0
        %847 = vmatpush1.msra.mxu0 0.0
        %848 = vmatprep.subr.mxu0 0.0
        %849 = vmatpush1.msra.mxu0 0.0
        %850 = vmatprep.subr.mxu0 0.0
        %851 = vmatpush1.msra.mxu0 0.0
        %852 = vmatprep.subr.mxu0 0.0
        %853 = vmatpush1.msra.mxu0 0.0
        %854 = vmatprep.subr.mxu0 0.0
        %855 = vmatpush1.msra.mxu0 0.0
        %856 = vmatprep.subr.mxu0 0.0
        %857 = vmatpush1.msra.mxu0 0.0
        %858 = vmatprep.subr.mxu0 0.0
        %859 = vmatpush1.msra.mxu0 0.0
        %860 = vmatprep.subr.mxu0 0.0
        %861 = vmatpush1.msra.mxu0 0.0
        %862 = vmatprep.subr.mxu0 0.0
        %863 = vmatpush1.msra.mxu0 0.0
        %864 = vmatprep.subr.mxu0 0.0
        %865 = vmatpush1.msra.mxu0 0.0
        %866 = vmatprep.subr.mxu0 0.0
        %867 = vmatpush1.msra.mxu0 0.0
        %868 = vmatprep.subr.mxu0 0.0
        %869 = vmatpush1.msra.mxu0 0.0
        %870 = vmatprep.subr.mxu0 0.0
        %871 = vmatpush1.msra.mxu0 0.0
        %872 = vmatprep.subr.mxu0 0.0
        %873 = vmatpush1.msra.mxu0 0.0
        %874 = vmatprep.subr.mxu0 0.0
        %875 = vmatpush1.msra.mxu0 0.0
        %876 = vmatprep.subr.mxu0 0.0
        %877 = vmatpush1.msra.mxu0 0.0
        %878 = vmatprep.subr.mxu0 0.0
        %879 = vmatpush1.msra.mxu0 0.0
        %880 = vmatprep.subr.mxu0 0.0
        %881 = vmatpush1.msra.mxu0 0.0
        %882 = vmatprep.subr.mxu0 0.0
        %883 = vmatpush1.msra.mxu0 0.0
        %884 = vmatprep.subr.mxu0 0.0
        %885 = vmatpush1.msra.mxu0 0.0
        %886 = vmatprep.subr.mxu0 0.0
        %887 = vmatpush1.msra.mxu0 0.0
        %888 = vmatprep.subr.mxu0 0.0
        %889 = vmatpush1.msra.mxu0 0.0
        %890 = vmatprep.subr.mxu0 0.0
        %891 = vmatpush1.msra.mxu0 0.0
        %892 = vmatprep.subr.mxu0 0.0
        %893 = vmatpush1.msra.mxu0 0.0
        %894 = vmatprep.subr.mxu0 0.0
        %895 = vmatpush1.msra.mxu0 0.0
        %896 = vmatprep.subr.mxu0 0.0
        %897 = vmatpush1.msra.mxu0 0.0
        %898 = vmatprep.subr.mxu0 0.0
        %899 = vmatpush1.msra.mxu0 0.0
        %900 = vmatprep.mubr.f32.mxu0 0.0
        %901 = vmatmul.mubr.f32.gmra.mrb[0].mxu0 %v834
        %v902 = vpop.f32.mrb[0].mxu0
        %v903 = vadd.f32 %v831, %v902
        %v904 = vpop.f32.mrb[0].mxu0
        %905 = vdwg.mxu0
        %v906 = vld [vmem:[%s7] sm:$0xff]
        %v907 = vld [vmem:[%s7 + $0x8] sm:$0xff]
        %v908 = vld [vmem:[%s7 + $0x10] sm:$0xff]
        %v909 = vld [vmem:[%s7 + $0x18] sm:$0xff]
        %v910 = vld [vmem:[%s9] sm:$0x1]
        %v912 = vlaneseq
        %v913 = vshrl.u32 %v912, 7
        %v914 = vsub.s32 0, %v913
        %v915 = vrot.slane %v910, %v914
        %917 = vmatprep.subr.mxu0 0.0
        %918 = vmatpush1.msra.mxu0 %v906
        %919 = vmatprep.subr.mxu0 0.0
        %920 = vmatpush1.msra.mxu0 %v907
        %921 = vmatprep.subr.mxu0 0.0
        %922 = vmatpush1.msra.mxu0 %v908
        %923 = vmatprep.subr.mxu0 0.0
        %924 = vmatpush1.msra.mxu0 %v909
        %925 = vmatprep.subr.mxu0 0.0
        %926 = vmatpush1.msra.mxu0 0.0
        %927 = vmatprep.subr.mxu0 0.0
        %928 = vmatpush1.msra.mxu0 0.0
        %929 = vmatprep.subr.mxu0 0.0
        %930 = vmatpush1.msra.mxu0 0.0
        %931 = vmatprep.subr.mxu0 0.0
        %932 = vmatpush1.msra.mxu0 0.0
        %933 = vmatprep.subr.mxu0 0.0
        %934 = vmatpush1.msra.mxu0 0.0
        %935 = vmatprep.subr.mxu0 0.0
        %936 = vmatpush1.msra.mxu0 0.0
        %937 = vmatprep.subr.mxu0 0.0
        %938 = vmatpush1.msra.mxu0 0.0
        %939 = vmatprep.subr.mxu0 0.0
        %940 = vmatpush1.msra.mxu0 0.0
        %941 = vmatprep.subr.mxu0 0.0
        %942 = vmatpush1.msra.mxu0 0.0
        %943 = vmatprep.subr.mxu0 0.0
        %944 = vmatpush1.msra.mxu0 0.0
        %945 = vmatprep.subr.mxu0 0.0
        %946 = vmatpush1.msra.mxu0 0.0
        %947 = vmatprep.subr.mxu0 0.0
        %948 = vmatpush1.msra.mxu0 0.0
        %949 = vmatprep.subr.mxu0 0.0
        %950 = vmatpush1.msra.mxu0 0.0
        %951 = vmatprep.subr.mxu0 0.0
        %952 = vmatpush1.msra.mxu0 0.0
        %953 = vmatprep.subr.mxu0 0.0
        %954 = vmatpush1.msra.mxu0 0.0
        %955 = vmatprep.subr.mxu0 0.0
        %956 = vmatpush1.msra.mxu0 0.0
        %957 = vmatprep.subr.mxu0 0.0
        %958 = vmatpush1.msra.mxu0 0.0
        %959 = vmatprep.subr.mxu0 0.0
        %960 = vmatpush1.msra.mxu0 0.0
        %961 = vmatprep.subr.mxu0 0.0
        %962 = vmatpush1.msra.mxu0 0.0
        %963 = vmatprep.subr.mxu0 0.0
        %964 = vmatpush1.msra.mxu0 0.0
        %965 = vmatprep.subr.mxu0 0.0
        %966 = vmatpush1.msra.mxu0 0.0
        %967 = vmatprep.subr.mxu0 0.0
        %968 = vmatpush1.msra.mxu0 0.0
        %969 = vmatprep.subr.mxu0 0.0
        %970 = vmatpush1.msra.mxu0 0.0
        %971 = vmatprep.subr.mxu0 0.0
        %972 = vmatpush1.msra.mxu0 0.0
        %973 = vmatprep.subr.mxu0 0.0
        %974 = vmatpush1.msra.mxu0 0.0
        %975 = vmatprep.subr.mxu0 0.0
        %976 = vmatpush1.msra.mxu0 0.0
        %977 = vmatprep.subr.mxu0 0.0
        %978 = vmatpush1.msra.mxu0 0.0
        %979 = vmatprep.subr.mxu0 0.0
        %980 = vmatpush1.msra.mxu0 0.0
        %981 = vmatprep.mubr.f32.mxu0 0.0
        %982 = vmatmul.mubr.f32.gmra.mrb[0].mxu0 %v834
        %v983 = vpop.f32.mrb[0].mxu0
        %v984 = vadd.f32 %v915, %v983
        %v985 = vpop.f32.mrb[0].mxu0
        %986 = vdwg.mxu0
        %v987 = vxor.u32 %v903, 2147483648
        %v988 = vmul.f32 %v987, 1.442695
        %v989 = vpow.pop %v988
        %v990 = vadd.f32 %v989, 1.0
        %v991 = vrcp.pop %v990
        %v992 = vmul.f32 1.0, %v991
        %v993 = vmul.f32 %v903, %v992
        %995 = vrot.lane.b32.xlu0 %v489, 96
        %v996 = vpop.permute.xlu0 %995
        %v998 = vmul.f32 %v984, %v996
        %1000 = vrot.lane.b32.xlu0 %v565, 96
        %v1001 = vpop.permute.xlu0 %1000
        %v1003 = vmul.f32 %v984, %v1001
        %1005 = vrot.lane.b32.xlu0 %v641, 96
        %v1006 = vpop.permute.xlu0 %1005
        %v1008 = vmul.f32 %v984, %v1006
        %1010 = vrot.lane.b32.xlu0 %v998, 16
        %v1011 = vpop.permute.xlu0 %1010
        %1014 = vrot.lane.b32.xlu0 %v1003, 32
        %v1015 = vpop.permute.xlu0 %1014
        %1018 = vrot.lane.b32.xlu0 %v1008, 48
        %v1019 = vpop.permute.xlu0 %1018
        %vm1021 = vcmask 130048
        %v1022 = vsel %vm1021, %v993, %v1011
        %v1023 = vsel %vm418, %v1022, %v1015
        %vm1024 = vcmask 392192
        %v1025 = vsel %vm1024, %v1023, %v1019
        %vm1026 = vcmask 523264
        %1027 = vst.msk [vmem:[%s411] sm:$0xff] %vm1026, %v1025
        %s1028 = sand.u32 %s258, 1
        %s1029 = scalar_lea.sflag [#allocation4], %s1028
        %s1030 = sand.u32 %s258, 1
        %s1031 = smul.addr %s1030, 8
        %s1032 = scalar_lea.vmem [#allocation7], %s1031
        // Predicated region
        $region69: #{tpu_custom_call.1} parent=59 // pred_check
          %p1033 = pneg %p268
        $region70: #{tpu_custom_call.1} parent=59 // pred_check_branch
          %1035 = sbr.rel (%p1033) target = $region72
        $region71: #{tpu_custom_call.1} parent=59 // pred_region
          %s1037 = ssub.s32 128, 128
          %1038 = vsyncadd %s1029, %s1037
          %s1039 = smul.addr %s30, 128
          %s1040 = scalar_lea.hbm %s10, %s1039
          %s1042 = sshll.u32 %s1032, 4
          %s1043 = int_to_ptr.vmem [resolvable:$true] %s1042
          %1045 = dma.vmem_to_hbm [thread:$0]  %s1043, 128, %s1040, %s1029
        $region72: #{tpu_custom_call.1} parent=59 // pred_fallthru
          _
      $region60: #{tpu_custom_call.1} parent=5 // pred_fallthru
        _
      %p1046 = scmp.le.s32.totalorder 2, %s25
      // Predicated region
      $region73: #{tpu_custom_call.1} parent=5 // pred_check
        %p1047 = pneg %p1046
      $region74: #{tpu_custom_call.1} parent=5 // pred_check_branch
        %1049 = sbr.rel (%p1047) target = $region76
      $region75: #{tpu_custom_call.1} parent=5 // pred_region
        %s1050 = ssub.s32 %s25, 2
        // Predicated region
        $region77: #{tpu_custom_call.1} parent=75 // pred_check
          %p1051 = pneg %p274
        $region78: #{tpu_custom_call.1} parent=75 // pred_check_branch
          %1053 = sbr.rel (%p1051) target = $region80
        $region79: #{tpu_custom_call.1} parent=75 // pred_region
          %s1054 = sand.u32 %s259, 1
          %s1055 = scalar_lea.sflag [#allocation4], %s1054
          %s1056 = sand.u32 %s259, 1
          %s1057 = smul.addr %s1056, 8
          %s1058 = scalar_lea.vmem [#allocation7], %s1057
          %1059 = dma.done %s1055, 128
        $region80: #{tpu_custom_call.1} parent=75 // pred_fallthru
          _
      $region76: #{tpu_custom_call.1} parent=5 // pred_fallthru
        _
    $region6: #{tpu_custom_call.1} parent=1 // loop_footer
      %s29 = sadd.s32 1, %s25
    $region7: #{tpu_custom_call.1} parent=1 // loop_footer_branch
      %24 = sbr.rel target = $region3
    $region8: #{tpu_custom_call.1} parent=1 // loop_exit
      _
    %1060 = vsyncpa [#allocation3], 1
    %s1061 = scalar_lea.sflag [#allocation3], 1
    %1062 = vsyncpa %s1061, 1
    %1063 = vsyncpa [#allocation6], 1
    %s1064 = scalar_lea.sflag [#allocation6], 1
    %1065 = vsyncpa %s1064, 1
    %1066 = vsyncpa [#allocation4], 1
    %s1067 = scalar_lea.sflag [#allocation4], 1
    %1068 = vsyncpa %s1067, 1

</llo_original>
